<compile_context>
chip_gen: v7x
topology: tpu7x:2x2x1
jax: 0.10.0
libtpu: 0.0.40
codegen_flags: <defaults>
</compile_context>

<pallas_src>
import functools

import jax
import jax.numpy as jnp
from jax.experimental import pallas as pl
from jax.experimental.pallas import tpu as pltpu

IM_DIM = 784            # true output width (28*28)
IM_PAD = 896            # 7 * 128 -> lane-dense padded W2 / internal matmul N
Z_DIM = 16
HID = 128


def vae_decoder_kernel(z_ref, w1_ref, b1_ref, w2_ref, b2_ref, out_ref):
    # Two MXU matmuls (bf16 inputs, f32 accumulation) + VPU bias/ReLU + EUP
    # sigmoid.  Biases are added once per tile (no per-iteration broadcasts).
    z = z_ref[...].astype(jnp.bfloat16)                           # [TM, 16]
    h = jnp.dot(z, w1_ref[...], preferred_element_type=jnp.float32)
    h = jnp.maximum(h + b1_ref[...], 0.0)                         # bias + ReLU, f32
    o = jnp.dot(h.astype(jnp.bfloat16), w2_ref[...],
                preferred_element_type=jnp.float32)               # [TM, 896]
    o = o[:, :IM_DIM] + b2_ref[...]                               # [TM, 784]
    out_ref[...] = jax.nn.sigmoid(o).astype(out_ref.dtype)        # bf16 store


def _round_up(x, m):
    return ((x + m - 1) // m) * m


def _choose_tile(batch, tm):
    """Batch tile: multiple of 8, <= tm, and (when B > 8) small enough that the
    grid has >= 2 steps so the 'parallel' axis spans both v7x TensorCores."""
    b8 = _round_up(batch, 8)
    if b8 <= 8:
        return b8
    return min(tm, _round_up(pl.cdiv(b8, 2), 8))


@functools.partial(jax.jit, static_argnames=("tm",))
def vae_decoder(z, w1, b1, w2p, b2, *, tm=512):
    """z: [B, Z_DIM] f32 -> [B, IM_DIM] bf16.

    w1:  [Z_DIM, HID]   bf16 (pre-transposed vs PyTorch)
    b1:  [1, HID]       f32
    w2p: [HID, IM_PAD]  bf16 (zero-padded 784 -> 896, pre-transposed)
    b2:  [1, IM_DIM]    f32 (unpadded)
    """
    B = z.shape[0]
    tile_m = _choose_tile(B, tm)
    b_pad = _round_up(B, tile_m)
    if b_pad != B:
        z = jnp.pad(z, ((0, b_pad - B), (0, 0)))
    grid_m = b_pad // tile_m

    # Advisory cost estimate for XLA's scheduler.
    flops = 2 * b_pad * (Z_DIM * HID + HID * IM_PAD)
    transcendentals = b_pad * IM_DIM
    bytes_accessed = (b_pad * Z_DIM * 4                 # z (f32)
                      + Z_DIM * HID * 2 + HID * 4       # W1 (bf16) + b1 (f32)
                      + HID * IM_PAD * 2 + IM_DIM * 4   # W2 pad (bf16) + b2 (f32)
                      + b_pad * IM_DIM * 2)             # out (bf16)

    # Scoped-VMEM guard (only relevant on v5e's 16 MiB default with huge tiles).
    est_vmem = (2 * (tile_m * Z_DIM * 4 + tile_m * IM_DIM * 2)          # z/out, 2x buffered
                + 2 * (Z_DIM * HID * 2 + HID * 4 + HID * IM_PAD * 2 + IM_DIM * 4))
    cp_kwargs = dict(dimension_semantics=("parallel",))
    if est_vmem > 12 * 1024 * 1024:
        cp_kwargs["vmem_limit_bytes"] = min(2 * est_vmem, 100 * 1024 * 1024)

    out = pl.pallas_call(
        vae_decoder_kernel,
        out_shape=jax.ShapeDtypeStruct((b_pad, IM_DIM), jnp.bfloat16),
        grid=(grid_m,),
        in_specs=[
            pl.BlockSpec((tile_m, Z_DIM), lambda i: (i, 0)),
            # Weights / biases: constant index_map -> stay VMEM-resident across
            # grid steps (no re-DMA of the ~229 KB bf16 W2 per step).
            pl.BlockSpec((Z_DIM, HID), lambda i: (0, 0)),
            pl.BlockSpec((1, HID), lambda i: (0, 0)),
            pl.BlockSpec((HID, IM_PAD), lambda i: (0, 0)),
            pl.BlockSpec((1, IM_DIM), lambda i: (0, 0)),
        ],
        # 784-wide bf16 output stored directly: no post-kernel slice copy.
        out_specs=pl.BlockSpec((tile_m, IM_DIM), lambda i: (i, 0)),
        compiler_params=pltpu.CompilerParams(**cp_kwargs),
        cost_estimate=pl.CostEstimate(
            flops=flops, transcendentals=transcendentals,
            bytes_accessed=bytes_accessed),
    )(z, w1, b1, w2p, b2)

    return out if b_pad == B else out[:B]


def init_params(key):
    """Deterministic init mirroring nn.Linear default (uniform +/- 1/sqrt(fan_in)).
    Weights stored as [in_features, out_features] (transposed vs PyTorch)."""
    k1, k2, k3, k4 = jax.random.split(key, 4)
    bound1 = 1.0 / jnp.sqrt(Z_DIM)
    bound2 = 1.0 / jnp.sqrt(HID)
    w1 = jax.random.uniform(k1, (Z_DIM, HID), jnp.float32, -bound1, bound1)
    b1 = jax.random.uniform(k2, (1, HID), jnp.float32, -bound1, bound1)
    w2 = jax.random.uniform(k3, (HID, IM_DIM), jnp.float32, -bound2, bound2)
    b2 = jax.random.uniform(k4, (1, IM_DIM), jnp.float32, -bound2, bound2)
    return w1, b1, w2, b2


def prepare_params(w1, b1, w2, b2):
    """Cast weights to bf16; zero-pad W2's 784-wide N dim up to 896 lanes.
    b2 stays unpadded (added after the in-kernel slice to 784)."""
    w2p = jnp.zeros((HID, IM_PAD), jnp.float32).at[:, :IM_DIM].set(w2)
    return (w1.astype(jnp.bfloat16), b1.astype(jnp.float32),
            w2p.astype(jnp.bfloat16), b2.astype(jnp.float32))


def reference(z, w1_bf16, b1, w2p_bf16, b2):
    """Pure-JAX reference using the same (bf16-quantized) weights, f32 math."""
    w1 = w1_bf16.astype(jnp.float32)
    w2 = w2p_bf16.astype(jnp.float32)[:, :IM_DIM]
    h = jnp.maximum(z @ w1 + b1, 0.0)
    return jax.nn.sigmoid(h @ w2 + b2)


if __name__ == "__main__":
    key = jax.random.PRNGKey(0)
    kp, kz = jax.random.split(key)
    w1, b1, w2, b2 = init_params(kp)
    w1q, b1q, w2q, b2q = prepare_params(w1, b1, w2, b2)

    # Primary small-shape check (single grid step).
    B = 8
    z = jax.random.normal(kz, (B, Z_DIM), jnp.float32)
    out = jax.block_until_ready(vae_decoder(z, w1q, b1q, w2q, b2q))
    ref = reference(z, w1q, b1q, w2q, b2q)
    assert out.shape == (B, IM_DIM) and out.dtype == jnp.bfloat16
    # bf16 weights/activations + bf16 output store -> loosened tolerance.
    assert jnp.allclose(out.astype(jnp.float32), ref, atol=2e-2, rtol=2e-2), \
        "mismatch vs pure-JAX reference (B=8)"

    # Second check exercises grid_m >= 2 (v7x dual-TC split) + multi-tile path.
    B2 = 48
    z2 = jax.random.normal(jax.random.PRNGKey(1), (B2, Z_DIM), jnp.float32)
    out2 = jax.block_until_ready(vae_decoder(z2, w1q, b1q, w2q, b2q))
    ref2 = reference(z2, w1q, b1q, w2q, b2q)
    assert out2.shape == (B2, IM_DIM)
    assert jnp.allclose(out2.astype(jnp.float32), ref2, atol=2e-2, rtol=2e-2), \
        "mismatch vs pure-JAX reference (B=48)"

    print("KERNEL_OK")
</pallas_src>

<mosaic_0001>
module attributes {stable_mosaic.version = 11 : i64} {
  func.func @vae_decoder_kernel(%arg0: i32, %arg1: memref<8x16xf32, #tpu.memory_space<vmem>>, %arg2: memref<16x128xbf16, #tpu.memory_space<vmem>>, %arg3: memref<1x128xf32, #tpu.memory_space<vmem>>, %arg4: memref<128x896xbf16, #tpu.memory_space<vmem>>, %arg5: memref<1x784xf32, #tpu.memory_space<vmem>>, %arg6: memref<8x784xbf16, #tpu.memory_space<vmem>>) attributes {dimension_semantics = [#tpu.dimension_semantics<parallel>], iteration_bounds = array<i64: 1>, scalar_prefetch = 0 : i64, scratch_operands = 0 : i64, tpu.core_type = #tpu.core_type<tc>, window_params = [{transform_indices = @transform_0, window_bounds = array<i64: 8, 16>}, {pipeline_mode = #tpu.pipeline_mode<synchronous>, transform_indices = @transform_1, window_bounds = array<i64: 16, 128>}, {pipeline_mode = #tpu.pipeline_mode<synchronous>, transform_indices = @transform_2, window_bounds = array<i64: 1, 128>}, {pipeline_mode = #tpu.pipeline_mode<synchronous>, transform_indices = @transform_3, window_bounds = array<i64: 128, 896>}, {pipeline_mode = #tpu.pipeline_mode<synchronous>, transform_indices = @transform_4, window_bounds = array<i64: 1, 784>}, {transform_indices = @transform_5, window_bounds = array<i64: 8, 784>}]} {
    %c0 = arith.constant 0 : index
    %c0_0 = arith.constant 0 : index
    %0 = vector.load %arg1[%c0, %c0_0] : memref<8x16xf32, #tpu.memory_space<vmem>>, vector<8x16xf32>
    %1 = arith.truncf %0 : vector<8x16xf32> to vector<8x16xbf16>
    %c0_1 = arith.constant 0 : index
    %c0_2 = arith.constant 0 : index
    %2 = vector.load %arg2[%c0_1, %c0_2] : memref<16x128xbf16, #tpu.memory_space<vmem>>, vector<16x128xbf16>
    %cst = arith.constant dense<0.000000e+00> : vector<8x128xf32>
    %3 = tpu.matmul %1, %2, %cst {dimension_numbers = #tpu.dot_dimension_numbers<[1], [0], [0], [1], [0, 0, 1, 1], [], []>} : vector<8x16xbf16>, vector<16x128xbf16>, vector<8x128xf32> -> vector<8x128xf32>
    %c0_3 = arith.constant 0 : index
    %c0_4 = arith.constant 0 : index
    %4 = vector.load %arg3[%c0_3, %c0_4] : memref<1x128xf32, #tpu.memory_space<vmem>>, vector<1x128xf32>
    %5 = vector.broadcast %4 : vector<1x128xf32> to vector<8x128xf32>
    %6 = arith.addf %3, %5 : vector<8x128xf32>
    %cst_5 = arith.constant 0.000000e+00 : f32
    %7 = vector.broadcast %cst_5 : f32 to vector<8x128xf32>
    %8 = arith.maximumf %6, %7 : vector<8x128xf32>
    %9 = arith.truncf %8 : vector<8x128xf32> to vector<8x128xbf16>
    %c0_6 = arith.constant 0 : index
    %c0_7 = arith.constant 0 : index
    %10 = vector.load %arg4[%c0_6, %c0_7] : memref<128x896xbf16, #tpu.memory_space<vmem>>, vector<128x896xbf16>
    %cst_8 = arith.constant dense<0.000000e+00> : vector<8x896xf32>
    %11 = tpu.matmul %9, %10, %cst_8 {dimension_numbers = #tpu.dot_dimension_numbers<[1], [0], [0], [1], [0, 0, 1, 1], [], []>} : vector<8x128xbf16>, vector<128x896xbf16>, vector<8x896xf32> -> vector<8x896xf32>
    %12 = vector.extract_strided_slice %11 {offsets = [0, 0], sizes = [8, 784], strides = [1, 1]} : vector<8x896xf32> to vector<8x784xf32>
    %c0_9 = arith.constant 0 : index
    %c0_10 = arith.constant 0 : index
    %13 = vector.load %arg5[%c0_9, %c0_10] : memref<1x784xf32, #tpu.memory_space<vmem>>, vector<1x784xf32>
    %14 = vector.broadcast %13 : vector<1x784xf32> to vector<8x784xf32>
    %15 = arith.addf %12, %14 : vector<8x784xf32>
    %16 = arith.negf %15 : vector<8x784xf32>
    %17 = math.exp %16 : vector<8x784xf32>
    %cst_11 = arith.constant 1.000000e+00 : f32
    %18 = vector.broadcast %cst_11 : f32 to vector<8x784xf32>
    %19 = arith.addf %18, %17 : vector<8x784xf32>
    %20 = arith.divf %18, %19 : vector<8x784xf32>
    %21 = arith.truncf %20 : vector<8x784xf32> to vector<8x784xbf16>
    %c0_12 = arith.constant 0 : index
    %c0_13 = arith.constant 0 : index
    %22 = vector.load %arg6[%c0_12, %c0_13] : memref<8x784xbf16, #tpu.memory_space<vmem>>, vector<8x784xbf16>
    tpu.vector_store %arg6[%c0_12, %c0_13], %21 {strides = array<i32>} : memref<8x784xbf16, #tpu.memory_space<vmem>>, vector<8x784xbf16>,
    return
  }
  func.func @transform_0(%arg0: i32) -> (i32, i32) {
    %c0_i32 = arith.constant 0 : i32
    %c0_i32_0 = arith.constant 0 : i32
    return %arg0, %c0_i32 : i32, i32
  }
  func.func @transform_1(%arg0: i32) -> (i32, i32) {
    %c0_i32 = arith.constant 0 : i32
    %c0_i32_0 = arith.constant 0 : i32
    %c0_i32_1 = arith.constant 0 : i32
    return %c0_i32, %c0_i32_0 : i32, i32
  }
  func.func @transform_2(%arg0: i32) -> (i32, i32) {
    %c0_i32 = arith.constant 0 : i32
    %c0_i32_0 = arith.constant 0 : i32
    %c0_i32_1 = arith.constant 0 : i32
    return %c0_i32, %c0_i32_0 : i32, i32
  }
  func.func @transform_3(%arg0: i32) -> (i32, i32) {
    %c0_i32 = arith.constant 0 : i32
    %c0_i32_0 = arith.constant 0 : i32
    %c0_i32_1 = arith.constant 0 : i32
    return %c0_i32, %c0_i32_0 : i32, i32
  }
  func.func @transform_4(%arg0: i32) -> (i32, i32) {
    %c0_i32 = arith.constant 0 : i32
    %c0_i32_0 = arith.constant 0 : i32
    %c0_i32_1 = arith.constant 0 : i32
    return %c0_i32, %c0_i32_0 : i32, i32
  }
  func.func @transform_5(%arg0: i32) -> (i32, i32) {
    %c0_i32 = arith.constant 0 : i32
    %c0_i32_0 = arith.constant 0 : i32
    return %arg0, %c0_i32 : i32, i32
  }
}

</mosaic_0001>

<llo_original>
// kernel: vae_decoder.1
$region0: #{vae_decoder.1}
  #allocation0 [shape = 'u32[]', space=smem, size = 0x4, offset = 0x4, fixed_abs, tag = 'smem constant byte address 0x4 - core index']
  #allocation1 [shape = 'u32[144,128]{1,0:T(1,128)}', space=vmem, size = 0x12000, scoped, tag = 'internal scratch']
  %s0 = inlined_call_operand.hbm [shape: f32[8,16], index: 0, kind: input, shape index: {}]
  %s1 = inlined_call_operand.hbm [shape: bf16[16,128], index: 1, kind: input, shape index: {}]
  %s2 = inlined_call_operand.vmem [shape: f32[1,128], index: 2, kind: input, shape index: {}]
  %s3 = inlined_call_operand.hbm [shape: bf16[128,896], index: 3, kind: input, shape index: {}]
  %s4 = inlined_call_operand.vmem [shape: f32[1,784], index: 4, kind: input, shape index: {}]
  %s5 = inlined_call_operand.hbm [shape: bf16[8,784], index: 5, kind: output, shape index: {}]
  %s6 = sld [smem:[#allocation0]]
  $region42: #{vae_decoder.1} parent=0
    _
  %s8 = ssub.s32 1, %s6
  %s9 = scalar_select 0, %s8, %s6
  $region1: #{vae_decoder.1} parent=0
    #allocation2 [shape = 'u8[4096]{0}', space=vmem, size = 0x1000, scoped, tag = 'input window, operand 0, single buffered']
    #allocation3 [shape = 's32[1]{0}', space=sflag, size = 0x4, scoped, tag = 'scoped memory for vae_decoder.1']
    #allocation4 [shape = 's32[1]{0}', space=sflag, size = 0x4, scoped, tag = 'scoped memory for vae_decoder.1']
    #allocation5 [shape = 'u8[4096]{0}', space=vmem, size = 0x1000, scoped, tag = 'input window, operand 1, single buffered']
    #allocation6 [shape = 's32[1]{0}', space=sflag, size = 0x4, scoped, tag = 'scoped memory for vae_decoder.1']
    #allocation7 [shape = 'u8[229376]{0}', space=vmem, size = 0x38000, scoped, tag = 'input window, operand 3, single buffered']
    #allocation8 [shape = 'u8[14336]{0}', space=vmem, size = 0x3800, scoped, tag = 'output window, operand 0, single buffered']
    %10 = vsyncpa [#allocation3], 0
    %11 = vsyncpa [#allocation6], 0
    %12 = vsyncpa [#allocation4], 0
    // Predicated region
    $region2: #{vae_decoder.1} parent=1 // pred_check
      _
    $region3: #{vae_decoder.1} parent=1 // pred_check_branch
      %14 = sbr.rel (0) target = $region5
    $region4: #{vae_decoder.1} parent=1 // pred_region
      %s16 = ssub.s32 128, 128
      %17 = vsyncadd [#allocation3], %s16
      %s19 = sshll.u32 [#allocation2], 4
      %s20 = int_to_ptr.vmem [resolvable:$true] %s19
      %22 = dma.hbm_to_vmem [thread:$0]  %s0, 128, %s20, [#allocation3]
    $region5: #{vae_decoder.1} parent=1 // pred_fallthru
      _
    // Predicated region
    $region6: #{vae_decoder.1} parent=1 // pred_check
      _
    $region7: #{vae_decoder.1} parent=1 // pred_check_branch
      %24 = sbr.rel (0) target = $region9
    $region8: #{vae_decoder.1} parent=1 // pred_region
      %s26 = ssub.s32 128, 128
      %27 = vsyncadd [#allocation6], %s26
      %s28 = sshll.u32 [#allocation5], 4
      %s29 = int_to_ptr.vmem [resolvable:$true] %s28
      %34 = dma.hbm_to_vmem [thread:$0]  %s1, 128, %s29, [#allocation6], 64, 64, 4
    $region9: #{vae_decoder.1} parent=1 // pred_fallthru
      _
    // Predicated region
    $region10: #{vae_decoder.1} parent=1 // pred_check
      _
    $region11: #{vae_decoder.1} parent=1 // pred_check_branch
      %36 = sbr.rel (0) target = $region13
    $region12: #{vae_decoder.1} parent=1 // pred_region
      _
    $region13: #{vae_decoder.1} parent=1 // pred_fallthru
      _
    // Predicated region
    $region14: #{vae_decoder.1} parent=1 // pred_check
      _
    $region15: #{vae_decoder.1} parent=1 // pred_check_branch
      %38 = sbr.rel (0) target = $region17
    $region16: #{vae_decoder.1} parent=1 // pred_region
      %s40 = ssub.s32 7168, 7168
      %41 = vsyncadd [#allocation6], %s40
      %s42 = sshll.u32 [#allocation7], 4
      %s43 = int_to_ptr.vmem [resolvable:$true] %s42
      %48 = dma.hbm_to_vmem [thread:$0]  %s3, 7168, %s43, [#allocation6], 448, 448, 28
    $region17: #{vae_decoder.1} parent=1 // pred_fallthru
      _
    // Predicated region
    $region18: #{vae_decoder.1} parent=1 // pred_check
      _
    $region19: #{vae_decoder.1} parent=1 // pred_check_branch
      %50 = sbr.rel (0) target = $region21
    $region20: #{vae_decoder.1} parent=1 // pred_region
      _
    $region21: #{vae_decoder.1} parent=1 // pred_fallthru
      _
    // Predicated region
    $region22: #{vae_decoder.1} parent=1 // pred_check
      _
    $region23: #{vae_decoder.1} parent=1 // pred_check_branch
      %52 = sbr.rel (0) target = $region25
    $region24: #{vae_decoder.1} parent=1 // pred_region
      %53 = dma.done [#allocation3], 128
    $region25: #{vae_decoder.1} parent=1 // pred_fallthru
      _
    // Predicated region
    $region26: #{vae_decoder.1} parent=1 // pred_check
      _
    $region27: #{vae_decoder.1} parent=1 // pred_check_branch
      %55 = sbr.rel (0) target = $region29
    $region28: #{vae_decoder.1} parent=1 // pred_region
      %56 = dma.done [#allocation6], 128
    $region29: #{vae_decoder.1} parent=1 // pred_fallthru
      _
    // Predicated region
    $region30: #{vae_decoder.1} parent=1 // pred_check
      _
    $region31: #{vae_decoder.1} parent=1 // pred_check_branch
      %58 = sbr.rel (0) target = $region33
    $region32: #{vae_decoder.1} parent=1 // pred_region
      %59 = dma.done [#allocation6], 7168
    $region33: #{vae_decoder.1} parent=1 // pred_fallthru
      _
    %v61 = vld [vmem:[#allocation2] sm:$0xff]
    %v62 = vpack.c.bf16 %v61, %v61
    %v63 = vld [vmem:[#allocation5] sm:$0xf]
    %v64 = vld [vmem:[#allocation5 + $0x4] sm:$0xf]
    %v65 = vld [vmem:[%s2] sm:$0x1]
    %v67 = vlaneseq
    %v68 = vshrl.u32 %v67, 7
    %v69 = vsub.s32 0, %v68
    %v70 = vrot.slane %v65, %v69
    %v74 = vunpack.c.l.b16 %v63
    %v75 = vunpack.c.l.b16 %v64
    %v76 = vpack.c.b16 %v75, %v74
    %vm78 = vcmask 130048
    %v80 = vsel %vm78, %v62, 0
    %82 = vmatprep.subr.bf16.mxu0 0
    %83 = vmatpush1.bf16.msra.mxu0 %v76
    %84 = vmatprep.subr.bf16.mxu0 0
    %85 = vmatpush1.bf16.msra.mxu0 0
    %86 = vmatprep.subr.bf16.mxu0 0
    %87 = vmatpush1.bf16.msra.mxu0 0
    %88 = vmatprep.subr.bf16.mxu0 0
    %89 = vmatpush1.bf16.msra.mxu0 0
    %90 = vmatprep.subr.bf16.mxu0 0
    %91 = vmatpush1.bf16.msra.mxu0 0
    %92 = vmatprep.subr.bf16.mxu0 0
    %93 = vmatpush1.bf16.msra.mxu0 0
    %94 = vmatprep.subr.bf16.mxu0 0
    %95 = vmatpush1.bf16.msra.mxu0 0
    %96 = vmatprep.subr.bf16.mxu0 0
    %97 = vmatpush1.bf16.msra.mxu0 0
    %98 = vmatprep.subr.bf16.mxu0 0
    %99 = vmatpush1.bf16.msra.mxu0 0
    %100 = vmatprep.subr.bf16.mxu0 0
    %101 = vmatpush1.bf16.msra.mxu0 0
    %102 = vmatprep.subr.bf16.mxu0 0
    %103 = vmatpush1.bf16.msra.mxu0 0
    %104 = vmatprep.subr.bf16.mxu0 0
    %105 = vmatpush1.bf16.msra.mxu0 0
    %106 = vmatprep.subr.bf16.mxu0 0
    %107 = vmatpush1.bf16.msra.mxu0 0
    %108 = vmatprep.subr.bf16.mxu0 0
    %109 = vmatpush1.bf16.msra.mxu0 0
    %110 = vmatprep.subr.bf16.mxu0 0
    %111 = vmatpush1.bf16.msra.mxu0 0
    %112 = vmatprep.subr.bf16.mxu0 0
    %113 = vmatpush1.bf16.msra.mxu0 0
    %114 = vmatprep.mubr.bf16.mxu0 0
    %115 = vmatmul.mubr.bf16.gmra.mrb[0].mxu0 %v80
    %v116 = vpop.f32.mrb[0].mxu0
    %v117 = vadd.f32 %v70, %v116
    %v118 = vpop.f32.mrb[0].mxu0
    %v119 = vpop.f32.mrb[0].mxu0
    %v120 = vpop.f32.mrb[0].mxu0
    %121 = vdwg.mxu0
    %v122 = vmax.f32 %v117, 0.0
    %v123 = vpack.c.bf16 %v122, %v122
    %v124 = vld [vmem:[#allocation7] sm:$0xff]
    %v125 = vld [vmem:[#allocation7 + $0x8] sm:$0xff]
    %v126 = vld [vmem:[#allocation7 + $0x10] sm:$0xff]
    %v127 = vld [vmem:[#allocation7 + $0x18] sm:$0xf]
    %v128 = vld [vmem:[#allocation7 + $0x1c] sm:$0xff]
    %v129 = vld [vmem:[#allocation7 + $0x24] sm:$0xff]
    %v130 = vld [vmem:[#allocation7 + $0x2c] sm:$0xff]
    %v131 = vld [vmem:[#allocation7 + $0x34] sm:$0xf]
    %v132 = vld [vmem:[#allocation7 + $0x38] sm:$0xff]
    %v133 = vld [vmem:[#allocation7 + $0x40] sm:$0xff]
    %v134 = vld [vmem:[#allocation7 + $0x48] sm:$0xff]
    %v135 = vld [vmem:[#allocation7 + $0x50] sm:$0xf]
    %v136 = vld [vmem:[#allocation7 + $0x54] sm:$0xff]
    %v137 = vld [vmem:[#allocation7 + $0x5c] sm:$0xff]
    %v138 = vld [vmem:[#allocation7 + $0x64] sm:$0xff]
    %v139 = vld [vmem:[#allocation7 + $0x6c] sm:$0xf]
    %v140 = vld [vmem:[#allocation7 + $0x70] sm:$0xff]
    %v141 = vld [vmem:[#allocation7 + $0x78] sm:$0xff]
    %v142 = vld [vmem:[#allocation7 + $0x80] sm:$0xff]
    %v143 = vld [vmem:[#allocation7 + $0x88] sm:$0xf]
    %v144 = vld [vmem:[#allocation7 + $0x8c] sm:$0xff]
    %v145 = vld [vmem:[#allocation7 + $0x94] sm:$0xff]
    %v146 = vld [vmem:[#allocation7 + $0x9c] sm:$0xff]
    %v147 = vld [vmem:[#allocation7 + $0xa4] sm:$0xf]
    %v148 = vld [vmem:[#allocation7 + $0xa8] sm:$0xff]
    %v149 = vld [vmem:[#allocation7 + $0xb0] sm:$0xff]
    %v150 = vld [vmem:[#allocation7 + $0xb8] sm:$0xff]
    %v151 = vld [vmem:[#allocation7 + $0xc0] sm:$0xf]
    %v152 = vld [vmem:[#allocation7 + $0xc4] sm:$0xff]
    %v153 = vld [vmem:[#allocation7 + $0xcc] sm:$0xff]
    %v154 = vld [vmem:[#allocation7 + $0xd4] sm:$0xff]
    %v155 = vld [vmem:[#allocation7 + $0xdc] sm:$0xf]
    %v156 = vld [vmem:[#allocation7 + $0xe0] sm:$0xff]
    %v157 = vld [vmem:[#allocation7 + $0xe8] sm:$0xff]
    %v158 = vld [vmem:[#allocation7 + $0xf0] sm:$0xff]
    %v159 = vld [vmem:[#allocation7 + $0xf8] sm:$0xf]
    %v160 = vld [vmem:[#allocation7 + $0xfc] sm:$0xff]
    %v161 = vld [vmem:[#allocation7 + $0x104] sm:$0xff]
    %v162 = vld [vmem:[#allocation7 + $0x10c] sm:$0xff]
    %v163 = vld [vmem:[#allocation7 + $0x114] sm:$0xf]
    %v164 = vld [vmem:[#allocation7 + $0x118] sm:$0xff]
    %v165 = vld [vmem:[#allocation7 + $0x120] sm:$0xff]
    %v166 = vld [vmem:[#allocation7 + $0x128] sm:$0xff]
    %v167 = vld [vmem:[#allocation7 + $0x130] sm:$0xf]
    %v168 = vld [vmem:[#allocation7 + $0x134] sm:$0xff]
    %v169 = vld [vmem:[#allocation7 + $0x13c] sm:$0xff]
    %v170 = vld [vmem:[#allocation7 + $0x144] sm:$0xff]
    %v171 = vld [vmem:[#allocation7 + $0x14c] sm:$0xf]
    %v172 = vld [vmem:[#allocation7 + $0x150] sm:$0xff]
    %v173 = vld [vmem:[#allocation7 + $0x158] sm:$0xff]
    %v174 = vld [vmem:[#allocation7 + $0x160] sm:$0xff]
    %v175 = vld [vmem:[#allocation7 + $0x168] sm:$0xf]
    %v176 = vld [vmem:[#allocation7 + $0x16c] sm:$0xff]
    %v177 = vld [vmem:[#allocation7 + $0x174] sm:$0xff]
    %v178 = vld [vmem:[#allocation7 + $0x17c] sm:$0xff]
    %v179 = vld [vmem:[#allocation7 + $0x184] sm:$0xf]
    %v180 = vld [vmem:[#allocation7 + $0x188] sm:$0xff]
    %v181 = vld [vmem:[#allocation7 + $0x190] sm:$0xff]
    %v182 = vld [vmem:[#allocation7 + $0x198] sm:$0xff]
    %v183 = vld [vmem:[#allocation7 + $0x1a0] sm:$0xf]
    %v184 = vld [vmem:[#allocation7 + $0x1a4] sm:$0xff]
    %v185 = vld [vmem:[#allocation7 + $0x1ac] sm:$0xff]
    %v186 = vld [vmem:[#allocation7 + $0x1b4] sm:$0xff]
    %v187 = vld [vmem:[#allocation7 + $0x1bc] sm:$0xf]
    %v252 = vunpack.c.l.b16 %v124
    %v253 = vunpack.c.h.b16 %v124
    %v254 = vunpack.c.l.b16 %v125
    %v255 = vunpack.c.h.b16 %v125
    %v256 = vunpack.c.l.b16 %v126
    %v257 = vunpack.c.h.b16 %v126
    %v258 = vunpack.c.l.b16 %v127
    %v259 = vunpack.c.l.b16 %v128
    %v260 = vunpack.c.h.b16 %v128
    %v261 = vunpack.c.l.b16 %v129
    %v262 = vunpack.c.h.b16 %v129
    %v263 = vunpack.c.l.b16 %v130
    %v264 = vunpack.c.h.b16 %v130
    %v265 = vunpack.c.l.b16 %v131
    %v266 = vunpack.c.l.b16 %v132
    %v267 = vunpack.c.h.b16 %v132
    %v268 = vunpack.c.l.b16 %v133
    %v269 = vunpack.c.h.b16 %v133
    %v270 = vunpack.c.l.b16 %v134
    %v271 = vunpack.c.h.b16 %v134
    %v272 = vunpack.c.l.b16 %v135
    %v273 = vunpack.c.l.b16 %v136
    %v274 = vunpack.c.h.b16 %v136
    %v275 = vunpack.c.l.b16 %v137
    %v276 = vunpack.c.h.b16 %v137
    %v277 = vunpack.c.l.b16 %v138
    %v278 = vunpack.c.h.b16 %v138
    %v279 = vunpack.c.l.b16 %v139
    %v280 = vunpack.c.l.b16 %v140
    %v281 = vunpack.c.h.b16 %v140
    %v282 = vunpack.c.l.b16 %v141
    %v283 = vunpack.c.h.b16 %v141
    %v284 = vunpack.c.l.b16 %v142
    %v285 = vunpack.c.h.b16 %v142
    %v286 = vunpack.c.l.b16 %v143
    %v287 = vunpack.c.l.b16 %v144
    %v288 = vunpack.c.h.b16 %v144
    %v289 = vunpack.c.l.b16 %v145
    %v290 = vunpack.c.h.b16 %v145
    %v291 = vunpack.c.l.b16 %v146
    %v292 = vunpack.c.h.b16 %v146
    %v293 = vunpack.c.l.b16 %v147
    %v294 = vunpack.c.l.b16 %v148
    %v295 = vunpack.c.h.b16 %v148
    %v296 = vunpack.c.l.b16 %v149
    %v297 = vunpack.c.h.b16 %v149
    %v298 = vunpack.c.l.b16 %v150
    %v299 = vunpack.c.h.b16 %v150
    %v300 = vunpack.c.l.b16 %v151
    %v301 = vunpack.c.l.b16 %v152
    %v302 = vunpack.c.h.b16 %v152
    %v303 = vunpack.c.l.b16 %v153
    %v304 = vunpack.c.h.b16 %v153
    %v305 = vunpack.c.l.b16 %v154
    %v306 = vunpack.c.h.b16 %v154
    %v307 = vunpack.c.l.b16 %v155
    %v308 = vunpack.c.l.b16 %v156
    %v309 = vunpack.c.h.b16 %v156
    %v310 = vunpack.c.l.b16 %v157
    %v311 = vunpack.c.h.b16 %v157
    %v312 = vunpack.c.l.b16 %v158
    %v313 = vunpack.c.h.b16 %v158
    %v314 = vunpack.c.l.b16 %v159
    %v315 = vunpack.c.l.b16 %v160
    %v316 = vunpack.c.h.b16 %v160
    %v317 = vunpack.c.l.b16 %v161
    %v318 = vunpack.c.h.b16 %v161
    %v319 = vunpack.c.l.b16 %v162
    %v320 = vunpack.c.h.b16 %v162
    %v321 = vunpack.c.l.b16 %v163
    %v322 = vunpack.c.l.b16 %v164
    %v323 = vunpack.c.h.b16 %v164
    %v324 = vunpack.c.l.b16 %v165
    %v325 = vunpack.c.h.b16 %v165
    %v326 = vunpack.c.l.b16 %v166
    %v327 = vunpack.c.h.b16 %v166
    %v328 = vunpack.c.l.b16 %v167
    %v329 = vunpack.c.l.b16 %v168
    %v330 = vunpack.c.h.b16 %v168
    %v331 = vunpack.c.l.b16 %v169
    %v332 = vunpack.c.h.b16 %v169
    %v333 = vunpack.c.l.b16 %v170
    %v334 = vunpack.c.h.b16 %v170
    %v335 = vunpack.c.l.b16 %v171
    %v336 = vunpack.c.l.b16 %v172
    %v337 = vunpack.c.h.b16 %v172
    %v338 = vunpack.c.l.b16 %v173
    %v339 = vunpack.c.h.b16 %v173
    %v340 = vunpack.c.l.b16 %v174
    %v341 = vunpack.c.h.b16 %v174
    %v342 = vunpack.c.l.b16 %v175
    %v343 = vunpack.c.l.b16 %v176
    %v344 = vunpack.c.h.b16 %v176
    %v345 = vunpack.c.l.b16 %v177
    %v346 = vunpack.c.h.b16 %v177
    %v347 = vunpack.c.l.b16 %v178
    %v348 = vunpack.c.h.b16 %v178
    %v349 = vunpack.c.l.b16 %v179
    %v350 = vunpack.c.l.b16 %v180
    %v351 = vunpack.c.h.b16 %v180
    %v352 = vunpack.c.l.b16 %v181
    %v353 = vunpack.c.h.b16 %v181
    %v354 = vunpack.c.l.b16 %v182
    %v355 = vunpack.c.h.b16 %v182
    %v356 = vunpack.c.l.b16 %v183
    %v357 = vunpack.c.l.b16 %v184
    %v358 = vunpack.c.h.b16 %v184
    %v359 = vunpack.c.l.b16 %v185
    %v360 = vunpack.c.h.b16 %v185
    %v361 = vunpack.c.l.b16 %v186
    %v362 = vunpack.c.h.b16 %v186
    %v363 = vunpack.c.l.b16 %v187
    %v364 = vpack.c.b16 %v259, %v252
    %v365 = vpack.c.b16 %v260, %v253
    %v366 = vpack.c.b16 %v261, %v254
    %v367 = vpack.c.b16 %v262, %v255
    %v368 = vpack.c.b16 %v263, %v256
    %v369 = vpack.c.b16 %v264, %v257
    %v370 = vpack.c.b16 %v265, %v258
    %v371 = vpack.c.b16 %v273, %v266
    %v372 = vpack.c.b16 %v274, %v267
    %v373 = vpack.c.b16 %v275, %v268
    %v374 = vpack.c.b16 %v276, %v269
    %v375 = vpack.c.b16 %v277, %v270
    %v376 = vpack.c.b16 %v278, %v271
    %v377 = vpack.c.b16 %v279, %v272
    %v378 = vpack.c.b16 %v287, %v280
    %v379 = vpack.c.b16 %v288, %v281
    %v380 = vpack.c.b16 %v289, %v282
    %v381 = vpack.c.b16 %v290, %v283
    %v382 = vpack.c.b16 %v291, %v284
    %v383 = vpack.c.b16 %v292, %v285
    %v384 = vpack.c.b16 %v293, %v286
    %v385 = vpack.c.b16 %v301, %v294
    %v386 = vpack.c.b16 %v302, %v295
    %v387 = vpack.c.b16 %v303, %v296
    %v388 = vpack.c.b16 %v304, %v297
    %v389 = vpack.c.b16 %v305, %v298
    %v390 = vpack.c.b16 %v306, %v299
    %v391 = vpack.c.b16 %v307, %v300
    %v392 = vpack.c.b16 %v315, %v308
    %v393 = vpack.c.b16 %v316, %v309
    %v394 = vpack.c.b16 %v317, %v310
    %v395 = vpack.c.b16 %v318, %v311
    %v396 = vpack.c.b16 %v319, %v312
    %v397 = vpack.c.b16 %v320, %v313
    %v398 = vpack.c.b16 %v321, %v314
    %v399 = vpack.c.b16 %v329, %v322
    %v400 = vpack.c.b16 %v330, %v323
    %v401 = vpack.c.b16 %v331, %v324
    %v402 = vpack.c.b16 %v332, %v325
    %v403 = vpack.c.b16 %v333, %v326
    %v404 = vpack.c.b16 %v334, %v327
    %v405 = vpack.c.b16 %v335, %v328
    %v406 = vpack.c.b16 %v343, %v336
    %v407 = vpack.c.b16 %v344, %v337
    %v408 = vpack.c.b16 %v345, %v338
    %v409 = vpack.c.b16 %v346, %v339
    %v410 = vpack.c.b16 %v347, %v340
    %v411 = vpack.c.b16 %v348, %v341
    %v412 = vpack.c.b16 %v349, %v342
    %v413 = vpack.c.b16 %v357, %v350
    %v414 = vpack.c.b16 %v358, %v351
    %v415 = vpack.c.b16 %v359, %v352
    %v416 = vpack.c.b16 %v360, %v353
    %v417 = vpack.c.b16 %v361, %v354
    %v418 = vpack.c.b16 %v362, %v355
    %v419 = vpack.c.b16 %v363, %v356
    %476 = vmatprep.subr.bf16.mxu0 %v365
    %477 = vmatpush1.bf16.msra.mxu0 %v364
    %478 = vmatprep.subr.bf16.mxu0 %v372
    %479 = vmatpush1.bf16.msra.mxu0 %v371
    %480 = vmatprep.subr.bf16.mxu0 %v379
    %481 = vmatpush1.bf16.msra.mxu0 %v378
    %482 = vmatprep.subr.bf16.mxu0 %v386
    %483 = vmatpush1.bf16.msra.mxu0 %v385
    %484 = vmatprep.subr.bf16.mxu0 %v393
    %485 = vmatpush1.bf16.msra.mxu0 %v392
    %486 = vmatprep.subr.bf16.mxu0 %v400
    %487 = vmatpush1.bf16.msra.mxu0 %v399
    %488 = vmatprep.subr.bf16.mxu0 %v407
    %489 = vmatpush1.bf16.msra.mxu0 %v406
    %490 = vmatprep.subr.bf16.mxu0 %v414
    %491 = vmatpush1.bf16.msra.mxu0 %v413
    %492 = vmatprep.subr.bf16.mxu0 0
    %493 = vmatpush1.bf16.msra.mxu0 0
    %494 = vmatprep.subr.bf16.mxu0 0
    %495 = vmatpush1.bf16.msra.mxu0 0
    %496 = vmatprep.subr.bf16.mxu0 0
    %497 = vmatpush1.bf16.msra.mxu0 0
    %498 = vmatprep.subr.bf16.mxu0 0
    %499 = vmatpush1.bf16.msra.mxu0 0
    %500 = vmatprep.subr.bf16.mxu0 0
    %501 = vmatpush1.bf16.msra.mxu0 0
    %502 = vmatprep.subr.bf16.mxu0 0
    %503 = vmatpush1.bf16.msra.mxu0 0
    %504 = vmatprep.subr.bf16.mxu0 0
    %505 = vmatpush1.bf16.msra.mxu0 0
    %506 = vmatprep.subr.bf16.mxu0 0
    %507 = vmatpush1.bf16.msra.mxu0 0
    %508 = vmatprep.mubr.bf16.mxu0 0
    %509 = vmatmul.mubr.bf16.gmra.mrb[0].mxu0 %v123
    %v510 = vpop.f32.mrb[0].mxu0
    %v511 = vadd.f32 0.0, %v510
    %v512 = vpop.f32.mrb[0].mxu0
    %v513 = vadd.f32 0.0, %v512
    %v514 = vpop.f32.mrb[0].mxu0
    %v515 = vpop.f32.mrb[0].mxu0
    %516 = vdwg.mxu0
    %517 = vmatprep.subr.bf16.mxu0 %v367
    %518 = vmatpush1.bf16.msra.mxu0 %v366
    %519 = vmatprep.subr.bf16.mxu0 %v374
    %520 = vmatpush1.bf16.msra.mxu0 %v373
    %521 = vmatprep.subr.bf16.mxu0 %v381
    %522 = vmatpush1.bf16.msra.mxu0 %v380
    %523 = vmatprep.subr.bf16.mxu0 %v388
    %524 = vmatpush1.bf16.msra.mxu0 %v387
    %525 = vmatprep.subr.bf16.mxu0 %v395
    %526 = vmatpush1.bf16.msra.mxu0 %v394
    %527 = vmatprep.subr.bf16.mxu0 %v402
    %528 = vmatpush1.bf16.msra.mxu0 %v401
    %529 = vmatprep.subr.bf16.mxu0 %v409
    %530 = vmatpush1.bf16.msra.mxu0 %v408
    %531 = vmatprep.subr.bf16.mxu0 %v416
    %532 = vmatpush1.bf16.msra.mxu0 %v415
    %533 = vmatprep.subr.bf16.mxu0 0
    %534 = vmatpush1.bf16.msra.mxu0 0
    %535 = vmatprep.subr.bf16.mxu0 0
    %536 = vmatpush1.bf16.msra.mxu0 0
    %537 = vmatprep.subr.bf16.mxu0 0
    %538 = vmatpush1.bf16.msra.mxu0 0
    %539 = vmatprep.subr.bf16.mxu0 0
    %540 = vmatpush1.bf16.msra.mxu0 0
    %541 = vmatprep.subr.bf16.mxu0 0
    %542 = vmatpush1.bf16.msra.mxu0 0
    %543 = vmatprep.subr.bf16.mxu0 0
    %544 = vmatpush1.bf16.msra.mxu0 0
    %545 = vmatprep.subr.bf16.mxu0 0
    %546 = vmatpush1.bf16.msra.mxu0 0
    %547 = vmatprep.subr.bf16.mxu0 0
    %548 = vmatpush1.bf16.msra.mxu0 0
    %549 = vmatprep.mubr.bf16.mxu0 0
    %550 = vmatmul.mubr.bf16.gmra.mrb[0].mxu0 %v123
    %v551 = vpop.f32.mrb[0].mxu0
    %v552 = vadd.f32 0.0, %v551
    %v553 = vpop.f32.mrb[0].mxu0
    %v554 = vadd.f32 0.0, %v553
    %v555 = vpop.f32.mrb[0].mxu0
    %v556 = vpop.f32.mrb[0].mxu0
    %557 = vdwg.mxu0
    %558 = vmatprep.subr.bf16.mxu0 %v369
    %559 = vmatpush1.bf16.msra.mxu0 %v368
    %560 = vmatprep.subr.bf16.mxu0 %v376
    %561 = vmatpush1.bf16.msra.mxu0 %v375
    %562 = vmatprep.subr.bf16.mxu0 %v383
    %563 = vmatpush1.bf16.msra.mxu0 %v382
    %564 = vmatprep.subr.bf16.mxu0 %v390
    %565 = vmatpush1.bf16.msra.mxu0 %v389
    %566 = vmatprep.subr.bf16.mxu0 %v397
    %567 = vmatpush1.bf16.msra.mxu0 %v396
    %568 = vmatprep.subr.bf16.mxu0 %v404
    %569 = vmatpush1.bf16.msra.mxu0 %v403
    %570 = vmatprep.subr.bf16.mxu0 %v411
    %571 = vmatpush1.bf16.msra.mxu0 %v410
    %572 = vmatprep.subr.bf16.mxu0 %v418
    %573 = vmatpush1.bf16.msra.mxu0 %v417
    %574 = vmatprep.subr.bf16.mxu0 0
    %575 = vmatpush1.bf16.msra.mxu0 0
    %576 = vmatprep.subr.bf16.mxu0 0
    %577 = vmatpush1.bf16.msra.mxu0 0
    %578 = vmatprep.subr.bf16.mxu0 0
    %579 = vmatpush1.bf16.msra.mxu0 0
    %580 = vmatprep.subr.bf16.mxu0 0
    %581 = vmatpush1.bf16.msra.mxu0 0
    %582 = vmatprep.subr.bf16.mxu0 0
    %583 = vmatpush1.bf16.msra.mxu0 0
    %584 = vmatprep.subr.bf16.mxu0 0
    %585 = vmatpush1.bf16.msra.mxu0 0
    %586 = vmatprep.subr.bf16.mxu0 0
    %587 = vmatpush1.bf16.msra.mxu0 0
    %588 = vmatprep.subr.bf16.mxu0 0
    %589 = vmatpush1.bf16.msra.mxu0 0
    %590 = vmatprep.mubr.bf16.mxu0 0
    %591 = vmatmul.mubr.bf16.gmra.mrb[0].mxu0 %v123
    %v592 = vpop.f32.mrb[0].mxu0
    %v593 = vadd.f32 0.0, %v592
    %v594 = vpop.f32.mrb[0].mxu0
    %v595 = vadd.f32 0.0, %v594
    %v596 = vpop.f32.mrb[0].mxu0
    %v597 = vpop.f32.mrb[0].mxu0
    %598 = vdwg.mxu0
    %599 = vmatprep.subr.bf16.mxu0 0
    %600 = vmatpush1.bf16.msra.mxu0 %v370
    %601 = vmatprep.subr.bf16.mxu0 0
    %602 = vmatpush1.bf16.msra.mxu0 %v377
    %603 = vmatprep.subr.bf16.mxu0 0
    %604 = vmatpush1.bf16.msra.mxu0 %v384
    %605 = vmatprep.subr.bf16.mxu0 0
    %606 = vmatpush1.bf16.msra.mxu0 %v391
    %607 = vmatprep.subr.bf16.mxu0 0
    %608 = vmatpush1.bf16.msra.mxu0 %v398
    %609 = vmatprep.subr.bf16.mxu0 0
    %610 = vmatpush1.bf16.msra.mxu0 %v405
    %611 = vmatprep.subr.bf16.mxu0 0
    %612 = vmatpush1.bf16.msra.mxu0 %v412
    %613 = vmatprep.subr.bf16.mxu0 0
    %614 = vmatpush1.bf16.msra.mxu0 %v419
    %615 = vmatprep.subr.bf16.mxu0 0
    %616 = vmatpush1.bf16.msra.mxu0 0
    %617 = vmatprep.subr.bf16.mxu0 0
    %618 = vmatpush1.bf16.msra.mxu0 0
    %619 = vmatprep.subr.bf16.mxu0 0
    %620 = vmatpush1.bf16.msra.mxu0 0
    %621 = vmatprep.subr.bf16.mxu0 0
    %622 = vmatpush1.bf16.msra.mxu0 0
    %623 = vmatprep.subr.bf16.mxu0 0
    %624 = vmatpush1.bf16.msra.mxu0 0
    %625 = vmatprep.subr.bf16.mxu0 0
    %626 = vmatpush1.bf16.msra.mxu0 0
    %627 = vmatprep.subr.bf16.mxu0 0
    %628 = vmatpush1.bf16.msra.mxu0 0
    %629 = vmatprep.subr.bf16.mxu0 0
    %630 = vmatpush1.bf16.msra.mxu0 0
    %631 = vmatprep.mubr.bf16.mxu0 0
    %632 = vmatmul.mubr.bf16.gmra.mrb[0].mxu0 %v123
    %v633 = vpop.f32.mrb[0].mxu0
    %v634 = vadd.f32 0.0, %v633
    %v635 = vpop.f32.mrb[0].mxu0
    %v636 = vpop.f32.mrb[0].mxu0
    %v637 = vpop.f32.mrb[0].mxu0
    %638 = vdwg.mxu0
    %v639 = vld [vmem:[%s4] sm:$0x7f]
    %v641 = vlaneseq
    %v642 = vshrl.u32 %v641, 7
    %v643 = vsub.s32 0, %v642
    %v644 = vrot.slane %v639, %v643
    %v645 = vlaneseq
    %v646 = vshrl.u32 %v645, 7
    %v647 = vsub.s32 1, %v646
    %v648 = vrot.slane %v639, %v647
    %v649 = vlaneseq
    %v650 = vshrl.u32 %v649, 7
    %v651 = vsub.s32 2, %v650
    %v652 = vrot.slane %v639, %v651
    %v653 = vlaneseq
    %v654 = vshrl.u32 %v653, 7
    %v655 = vsub.s32 3, %v654
    %v656 = vrot.slane %v639, %v655
    %v657 = vlaneseq
    %v658 = vshrl.u32 %v657, 7
    %v659 = vsub.s32 4, %v658
    %v660 = vrot.slane %v639, %v659
    %v661 = vlaneseq
    %v662 = vshrl.u32 %v661, 7
    %v663 = vsub.s32 5, %v662
    %v664 = vrot.slane %v639, %v663
    %v665 = vlaneseq
    %v666 = vshrl.u32 %v665, 7
    %v667 = vsub.s32 6, %v666
    %v668 = vrot.slane %v639, %v667
    %v676 = vadd.f32 %v511, %v644
    %v677 = vadd.f32 %v513, %v648
    %v678 = vadd.f32 %v552, %v652
    %v679 = vadd.f32 %v554, %v656
    %v680 = vadd.f32 %v593, %v660
    %v681 = vadd.f32 %v595, %v664
    %v682 = vadd.f32 %v634, %v668
    %v683 = vxor.u32 %v676, 2147483648
    %v684 = vxor.u32 %v677, 2147483648
    %v685 = vxor.u32 %v678, 2147483648
    %v686 = vxor.u32 %v679, 2147483648
    %v687 = vxor.u32 %v680, 2147483648
    %v688 = vxor.u32 %v681, 2147483648
    %v689 = vxor.u32 %v682, 2147483648
    %v690 = vmul.f32 %v683, 1.442695
    %v691 = vpow.pop %v690
    %v692 = vmul.f32 %v684, 1.442695
    %v693 = vpow.pop %v692
    %v694 = vmul.f32 %v685, 1.442695
    %v695 = vpow.pop %v694
    %v696 = vmul.f32 %v686, 1.442695
    %v697 = vpow.pop %v696
    %v698 = vmul.f32 %v687, 1.442695
    %v699 = vpow.pop %v698
    %v700 = vmul.f32 %v688, 1.442695
    %v701 = vpow.pop %v700
    %v702 = vmul.f32 %v689, 1.442695
    %v703 = vpow.pop %v702
    %v704 = vadd.f32 %v691, 1.0
    %v705 = vadd.f32 %v693, 1.0
    %v706 = vadd.f32 %v695, 1.0
    %v707 = vadd.f32 %v697, 1.0
    %v708 = vadd.f32 %v699, 1.0
    %v709 = vadd.f32 %v701, 1.0
    %v710 = vadd.f32 %v703, 1.0
    %v711 = vrcp.pop %v704
    %v712 = vmul.f32 1.0, %v711
    %v713 = vrcp.pop %v705
    %v714 = vmul.f32 1.0, %v713
    %v715 = vrcp.pop %v706
    %v716 = vmul.f32 1.0, %v715
    %v717 = vrcp.pop %v707
    %v718 = vmul.f32 1.0, %v717
    %v719 = vrcp.pop %v708
    %v720 = vmul.f32 1.0, %v719
    %v721 = vrcp.pop %v709
    %v722 = vmul.f32 1.0, %v721
    %v723 = vrcp.pop %v710
    %v724 = vmul.f32 1.0, %v723
    %v725 = vpack.c.bf16 %v712, %v712
    %v726 = vpack.c.bf16 %v714, %v714
    %v727 = vpack.c.bf16 %v716, %v716
    %v728 = vpack.c.bf16 %v718, %v718
    %v729 = vpack.c.bf16 %v720, %v720
    %v730 = vpack.c.bf16 %v722, %v722
    %v731 = vpack.c.bf16 %v724, %v724
    %v739 = vunpack.c.l.b16 %v725
    %v740 = vunpack.c.l.b16 %v726
    %v741 = vunpack.c.l.b16 %v727
    %v742 = vunpack.c.l.b16 %v728
    %v743 = vunpack.c.l.b16 %v729
    %v744 = vunpack.c.l.b16 %v730
    %v745 = vunpack.c.l.b16 %v731
    %v746 = vpack.c.b16 %v740, %v739
    %v747 = vpack.c.b16 %v742, %v741
    %v748 = vpack.c.b16 %v744, %v743
    %v749 = vpack.c.b16 %v745, %v745
    %754 = vst [vmem:[#allocation8] sm:$0xff] %v746
    %755 = vst [vmem:[#allocation8 + $0x8] sm:$0xff] %v747
    %756 = vst [vmem:[#allocation8 + $0x10] sm:$0xff] %v748
    %vm757 = vcmask 125952
    %758 = vst.msk [vmem:[#allocation8 + $0x18] sm:$0xf] %vm757, %v749
    // Predicated region
    $region34: #{vae_decoder.1} parent=1 // pred_check
      _
    $region35: #{vae_decoder.1} parent=1 // pred_check_branch
      %760 = sbr.rel (0) target = $region37
    $region36: #{vae_decoder.1} parent=1 // pred_region
      %s762 = ssub.s32 448, 448
      %763 = vsyncadd [#allocation4], %s762
      %s765 = sshll.u32 [#allocation8], 4
      %s766 = int_to_ptr.vmem [resolvable:$true] %s765
      %768 = dma.vmem_to_hbm [thread:$0]  %s766, 448, %s5, [#allocation4]
    $region37: #{vae_decoder.1} parent=1 // pred_fallthru
      _
    // Predicated region
    $region38: #{vae_decoder.1} parent=1 // pred_check
      _
    $region39: #{vae_decoder.1} parent=1 // pred_check_branch
      %770 = sbr.rel (0) target = $region41
    $region40: #{vae_decoder.1} parent=1 // pred_region
      %771 = dma.done [#allocation4], 448
    $region41: #{vae_decoder.1} parent=1 // pred_fallthru
      _
    %772 = vsyncpa [#allocation3], 1
    %773 = vsyncpa [#allocation6], 1
    %774 = vsyncpa [#allocation4], 1

</llo_original>
